<compile_context>
chip_gen: v7x
topology: tpu7x:2x2x1
jax: 0.10.0
libtpu: 0.0.40
codegen_flags: <defaults>
</compile_context>

<pallas_src>
import jax
import jax.numpy as jnp
from jax.experimental import pallas as pl
from jax.experimental.pallas import tpu as pltpu

STATE_DIM = 16
ACTION_DIM = 8
H1 = 512
H2 = 256
OUT = 1


def _round_up(x, m):
    return ((x + m - 1) // m) * m


def critic_kernel(s_ref, a_ref, w1_ref, b1_ref, w2_ref, b2_ref,
                  w3_ref, b3_ref, o_ref):
    # fc1: in-kernel concat (16 + 8 lanes) -> single K=24 MXU dot + ReLU.
    x = jnp.concatenate([s_ref[...], a_ref[...]], axis=-1).astype(jnp.bfloat16)
    h1 = jnp.dot(x, w1_ref[...], preferred_element_type=jnp.float32)
    h1 = jnp.maximum(h1 + b1_ref[...], 0.0)

    # fc2 + ReLU (bf16 MXU inputs, f32 accumulate).
    h2 = jnp.dot(h1.astype(jnp.bfloat16), w2_ref[...],
                 preferred_element_type=jnp.float32)
    h2 = jnp.maximum(h2 + b2_ref[...], 0.0)

    # fc3: VPU multiply + cross-lane reduce -> (TB,), then relaid out as a
    # lane-dense (1, TB) row (small XLU relayout on the otherwise-idle XLU).
    # NOTE: this path relies on OUT == 1 (w3 passed as a [1, H2] row vector).
    out = jnp.sum(h2 * w3_ref[...], axis=-1)
    o_ref[...] = (out.reshape(1, -1) + b3_ref[...]).astype(o_ref.dtype)


def critic_forward(states, actions, params, *, max_rows_per_tile=1024):
    """states: [B, state_dim], actions: [B, action_dim] -> [B, 1]."""
    w1, b1, w2, b2, w3, b3 = params
    B, s_dim = states.shape
    a_dim = actions.shape[1]
    d_in = s_dim + a_dim

    # Batch tiling: one full-batch tile for small B; otherwise >= 2 tiles
    # (megacore on v7x), each a multiple of 128 rows (lane-dense output
    # blocks) right-sized to cdiv(B, num_tiles) so the last tile carries
    # little padding.
    if B <= 512:
        tb = B
    else:
        num_tiles = max(2, pl.cdiv(B, max_rows_per_tile))
        tb = _round_up(pl.cdiv(B, num_tiles), 128)
    grid = (pl.cdiv(B, tb),)

    # Batch-tiled arrays step along the grid; weights always return block
    # (0, 0) so they stay VMEM-resident across steps (fetched once).
    batched = lambda shape: pl.BlockSpec(shape, lambda i: (i, 0))
    resident = lambda shape: pl.BlockSpec(shape, lambda i: (0, 0))

    flops = 2 * B * (d_in * H1 + H1 * H2 + H2 * OUT)
    bytes_accessed = (B * (d_in + OUT) * 4          # activations in/out (f32)
                      + (d_in * H1 + H1 * H2) * 2   # bf16 matmul weights
                      + (H1 + H2 + H2 + OUT) * 4)   # biases + fc3 weight (f32)

    out_row = pl.pallas_call(
        critic_kernel,
        out_shape=jax.ShapeDtypeStruct((1, B), jnp.float32),
        grid=grid,
        in_specs=[
            batched((tb, s_dim)),
            batched((tb, a_dim)),
            resident((d_in, H1)),
            resident((1, H1)),
            resident((H1, H2)),
            resident((1, H2)),
            resident((1, H2)),     # fc3 weight as a [1, H2] row vector
            resident((1, OUT)),
        ],
        out_specs=pl.BlockSpec((1, tb), lambda i: (0, i)),
        compiler_params=pltpu.CompilerParams(
            dimension_semantics=("parallel",)),
        cost_estimate=pl.CostEstimate(
            flops=flops, transcendentals=0, bytes_accessed=bytes_accessed),
    )(states, actions, w1, b1, w2, b2, w3, b3)

    return out_row.reshape(B, OUT)


def init_params(key, state_dim, action_dim):
    """Deterministic synthetic parameters (shapes match the nn.Linear layers).

    Weights are stored as [in_features, out_features] (transpose of PyTorch);
    w1/w2 are bf16 (MXU inputs), biases and the fc3 row vector stay f32.
    """
    d_in = state_dim + action_dim
    k1, k2, k3 = jax.random.split(key, 3)
    w1 = (jax.random.normal(k1, (d_in, H1), jnp.float32)
          * (1.0 / jnp.sqrt(d_in))).astype(jnp.bfloat16)
    b1 = jnp.zeros((1, H1), jnp.float32)
    w2 = (jax.random.normal(k2, (H1, H2), jnp.float32)
          * (1.0 / jnp.sqrt(H1))).astype(jnp.bfloat16)
    b2 = jnp.zeros((1, H2), jnp.float32)
    # fc3 weight as an f32 [1, H2] row vector (VPU path; valid because OUT==1).
    w3 = (jax.random.normal(k3, (H2, OUT), jnp.float32)
          * (1.0 / jnp.sqrt(H2))).reshape(1, H2)
    b3 = jnp.zeros((1, OUT), jnp.float32)
    return (w1, b1, w2, b2, w3, b3)


def critic_reference(states, actions, params):
    """Plain-JAX reference mirroring the same bf16-weight / f32-accumulate math."""
    w1, b1, w2, b2, w3, b3 = params
    x = jnp.concatenate([states, actions], axis=-1).astype(jnp.bfloat16)
    h1 = jnp.maximum(
        jnp.dot(x, w1, preferred_element_type=jnp.float32) + b1, 0.0)
    h2 = jnp.maximum(
        jnp.dot(h1.astype(jnp.bfloat16), w2,
                preferred_element_type=jnp.float32) + b2, 0.0)
    return jnp.sum(h2 * w3, axis=-1, keepdims=True) + b3


if __name__ == "__main__":
    key = jax.random.PRNGKey(0)
    kp, ks, ka, ks2, ka2 = jax.random.split(key, 5)
    params = init_params(kp, STATE_DIM, ACTION_DIM)

    # Small smoke test (single full-batch tile).
    B = 8
    states = jax.random.normal(ks, (B, STATE_DIM), jnp.float32)
    actions = jax.random.normal(ka, (B, ACTION_DIM), jnp.float32)
    out = critic_forward(states, actions, params)
    jax.block_until_ready(out)
    ref = critic_reference(states, actions, params)
    assert out.shape == (B, OUT)
    assert jnp.allclose(out, ref, atol=2e-2, rtol=2e-2), (
        f"max abs diff {jnp.max(jnp.abs(out - ref))}")

    # Multi-tile path: 2 tiles of 384 rows, padded last tile, lane-dense
    # output blocks, parallel batch axis (exercises the v7x megacore split).
    B2 = 600
    states2 = jax.random.normal(ks2, (B2, STATE_DIM), jnp.float32)
    actions2 = jax.random.normal(ka2, (B2, ACTION_DIM), jnp.float32)
    out2 = critic_forward(states2, actions2, params)
    jax.block_until_ready(out2)
    ref2 = critic_reference(states2, actions2, params)
    assert out2.shape == (B2, OUT)
    assert jnp.allclose(out2, ref2, atol=2e-2, rtol=2e-2), (
        f"max abs diff {jnp.max(jnp.abs(out2 - ref2))}")

    print("KERNEL_OK")
</pallas_src>

<mosaic_0001>
module attributes {stable_mosaic.version = 11 : i64} {
  func.func @critic_kernel(%arg0: i32, %arg1: memref<8x16xf32, #tpu.memory_space<vmem>>, %arg2: memref<8x8xf32, #tpu.memory_space<vmem>>, %arg3: memref<24x512xbf16, #tpu.memory_space<vmem>>, %arg4: memref<1x512xf32, #tpu.memory_space<vmem>>, %arg5: memref<512x256xbf16, #tpu.memory_space<vmem>>, %arg6: memref<1x256xf32, #tpu.memory_space<vmem>>, %arg7: memref<1x256xf32, #tpu.memory_space<vmem>>, %arg8: memref<1x1xf32, #tpu.memory_space<vmem>>, %arg9: memref<1x8xf32, #tpu.memory_space<vmem>>) attributes {dimension_semantics = [#tpu.dimension_semantics<parallel>], iteration_bounds = array<i64: 1>, scalar_prefetch = 0 : i64, scratch_operands = 0 : i64, tpu.core_type = #tpu.core_type<tc>, window_params = [{transform_indices = @transform_0, window_bounds = array<i64: 8, 16>}, {transform_indices = @transform_1, window_bounds = array<i64: 8, 8>}, {pipeline_mode = #tpu.pipeline_mode<synchronous>, transform_indices = @transform_2, window_bounds = array<i64: 24, 512>}, {pipeline_mode = #tpu.pipeline_mode<synchronous>, transform_indices = @transform_3, window_bounds = array<i64: 1, 512>}, {pipeline_mode = #tpu.pipeline_mode<synchronous>, transform_indices = @transform_4, window_bounds = array<i64: 512, 256>}, {pipeline_mode = #tpu.pipeline_mode<synchronous>, transform_indices = @transform_5, window_bounds = array<i64: 1, 256>}, {pipeline_mode = #tpu.pipeline_mode<synchronous>, transform_indices = @transform_6, window_bounds = array<i64: 1, 256>}, {pipeline_mode = #tpu.pipeline_mode<synchronous>, transform_indices = @transform_7, window_bounds = array<i64: 1, 1>}, {transform_indices = @transform_8, window_bounds = array<i64: 1, 8>}]} {
    %c0 = arith.constant 0 : index
    %c0_0 = arith.constant 0 : index
    %0 = vector.load %arg1[%c0, %c0_0] : memref<8x16xf32, #tpu.memory_space<vmem>>, vector<8x16xf32>
    %c0_1 = arith.constant 0 : index
    %c0_2 = arith.constant 0 : index
    %1 = vector.load %arg2[%c0_1, %c0_2] : memref<8x8xf32, #tpu.memory_space<vmem>>, vector<8x8xf32>
    %2 = tpu.concatenate %0, %1 in 1 : vector<8x16xf32>, vector<8x8xf32> -> vector<8x24xf32>
    %3 = arith.truncf %2 : vector<8x24xf32> to vector<8x24xbf16>
    %c0_3 = arith.constant 0 : index
    %c0_4 = arith.constant 0 : index
    %4 = vector.load %arg3[%c0_3, %c0_4] : memref<24x512xbf16, #tpu.memory_space<vmem>>, vector<24x512xbf16>
    %cst = arith.constant dense<0.000000e+00> : vector<8x512xf32>
    %5 = tpu.matmul %3, %4, %cst {dimension_numbers = #tpu.dot_dimension_numbers<[1], [0], [0], [1], [0, 0, 1, 1], [], []>} : vector<8x24xbf16>, vector<24x512xbf16>, vector<8x512xf32> -> vector<8x512xf32>
    %c0_5 = arith.constant 0 : index
    %c0_6 = arith.constant 0 : index
    %6 = vector.load %arg4[%c0_5, %c0_6] : memref<1x512xf32, #tpu.memory_space<vmem>>, vector<1x512xf32>
    %7 = vector.broadcast %6 : vector<1x512xf32> to vector<8x512xf32>
    %8 = arith.addf %5, %7 : vector<8x512xf32>
    %cst_7 = arith.constant 0.000000e+00 : f32
    %9 = vector.broadcast %cst_7 : f32 to vector<8x512xf32>
    %10 = arith.maximumf %8, %9 : vector<8x512xf32>
    %11 = arith.truncf %10 : vector<8x512xf32> to vector<8x512xbf16>
    %c0_8 = arith.constant 0 : index
    %c0_9 = arith.constant 0 : index
    %12 = vector.load %arg5[%c0_8, %c0_9] : memref<512x256xbf16, #tpu.memory_space<vmem>>, vector<512x256xbf16>
    %cst_10 = arith.constant dense<0.000000e+00> : vector<8x256xf32>
    %13 = tpu.matmul %11, %12, %cst_10 {dimension_numbers = #tpu.dot_dimension_numbers<[1], [0], [0], [1], [0, 0, 1, 1], [], []>} : vector<8x512xbf16>, vector<512x256xbf16>, vector<8x256xf32> -> vector<8x256xf32>
    %c0_11 = arith.constant 0 : index
    %c0_12 = arith.constant 0 : index
    %14 = vector.load %arg6[%c0_11, %c0_12] : memref<1x256xf32, #tpu.memory_space<vmem>>, vector<1x256xf32>
    %15 = vector.broadcast %14 : vector<1x256xf32> to vector<8x256xf32>
    %16 = arith.addf %13, %15 : vector<8x256xf32>
    %cst_13 = arith.constant 0.000000e+00 : f32
    %17 = vector.broadcast %cst_13 : f32 to vector<8x256xf32>
    %18 = arith.maximumf %16, %17 : vector<8x256xf32>
    %c0_14 = arith.constant 0 : index
    %c0_15 = arith.constant 0 : index
    %19 = vector.load %arg7[%c0_14, %c0_15] : memref<1x256xf32, #tpu.memory_space<vmem>>, vector<1x256xf32>
    %20 = vector.broadcast %19 : vector<1x256xf32> to vector<8x256xf32>
    %21 = arith.mulf %18, %20 : vector<8x256xf32>
    %cst_16 = arith.constant dense<0.000000e+00> : vector<8xf32>
    %22 = vector.multi_reduction <add>, %21, %cst_16 [1] : vector<8x256xf32> to vector<8xf32>
    %23 = vector.shape_cast %22 : vector<8xf32> to vector<1x8xf32>
    %c0_17 = arith.constant 0 : index
    %c0_18 = arith.constant 0 : index
    %24 = vector.load %arg8[%c0_17, %c0_18] : memref<1x1xf32, #tpu.memory_space<vmem>>, vector<1x1xf32>
    %25 = vector.broadcast %24 : vector<1x1xf32> to vector<1x8xf32>
    %26 = arith.addf %23, %25 : vector<1x8xf32>
    %c0_19 = arith.constant 0 : index
    %c0_20 = arith.constant 0 : index
    %27 = vector.load %arg9[%c0_19, %c0_20] : memref<1x8xf32, #tpu.memory_space<vmem>>, vector<1x8xf32>
    tpu.vector_store %arg9[%c0_19, %c0_20], %26 {strides = array<i32>} : memref<1x8xf32, #tpu.memory_space<vmem>>, vector<1x8xf32>,
    return
  }
  func.func @transform_0(%arg0: i32) -> (i32, i32) {
    %c0_i32 = arith.constant 0 : i32
    %c0_i32_0 = arith.constant 0 : i32
    return %arg0, %c0_i32 : i32, i32
  }
  func.func @transform_1(%arg0: i32) -> (i32, i32) {
    %c0_i32 = arith.constant 0 : i32
    %c0_i32_0 = arith.constant 0 : i32
    return %arg0, %c0_i32 : i32, i32
  }
  func.func @transform_2(%arg0: i32) -> (i32, i32) {
    %c0_i32 = arith.constant 0 : i32
    %c0_i32_0 = arith.constant 0 : i32
    %c0_i32_1 = arith.constant 0 : i32
    return %c0_i32, %c0_i32_0 : i32, i32
  }
  func.func @transform_3(%arg0: i32) -> (i32, i32) {
    %c0_i32 = arith.constant 0 : i32
    %c0_i32_0 = arith.constant 0 : i32
    %c0_i32_1 = arith.constant 0 : i32
    return %c0_i32, %c0_i32_0 : i32, i32
  }
  func.func @transform_4(%arg0: i32) -> (i32, i32) {
    %c0_i32 = arith.constant 0 : i32
    %c0_i32_0 = arith.constant 0 : i32
    %c0_i32_1 = arith.constant 0 : i32
    return %c0_i32, %c0_i32_0 : i32, i32
  }
  func.func @transform_5(%arg0: i32) -> (i32, i32) {
    %c0_i32 = arith.constant 0 : i32
    %c0_i32_0 = arith.constant 0 : i32
    %c0_i32_1 = arith.constant 0 : i32
    return %c0_i32, %c0_i32_0 : i32, i32
  }
  func.func @transform_6(%arg0: i32) -> (i32, i32) {
    %c0_i32 = arith.constant 0 : i32
    %c0_i32_0 = arith.constant 0 : i32
    %c0_i32_1 = arith.constant 0 : i32
    return %c0_i32, %c0_i32_0 : i32, i32
  }
  func.func @transform_7(%arg0: i32) -> (i32, i32) {
    %c0_i32 = arith.constant 0 : i32
    %c0_i32_0 = arith.constant 0 : i32
    %c0_i32_1 = arith.constant 0 : i32
    return %c0_i32, %c0_i32_0 : i32, i32
  }
  func.func @transform_8(%arg0: i32) -> (i32, i32) {
    %c0_i32 = arith.constant 0 : i32
    %c0_i32_0 = arith.constant 0 : i32
    return %c0_i32, %arg0 : i32, i32
  }
}

</mosaic_0001>

<llo_original>
// kernel: tpu_custom_call.1
$region0: #{tpu_custom_call.1}
  #allocation0 [shape = 'u32[]', space=smem, size = 0x4, offset = 0x4, fixed_abs, tag = 'smem constant byte address 0x4 - core index']
  #allocation1 [shape = 'u32[144,128]{1,0:T(1,128)}', space=vmem, size = 0x12000, scoped, tag = 'internal scratch']
  #allocation2 [shape = 'f32[1,1]{1,0:T(1,128)S(1)}', space=vmem, size = 0x200, scoped, tag = 'scoped memory for tpu_custom_call.1']
  %s0 = inlined_call_operand.hbm [shape: f32[8,16], index: 0, kind: input, shape index: {}]
  %s1 = inlined_call_operand.hbm [shape: f32[8,8], index: 1, kind: input, shape index: {}]
  %s2 = inlined_call_operand.hbm [shape: bf16[24,512], index: 2, kind: input, shape index: {}]
  %s3 = inlined_call_operand.vmem [shape: f32[1,512], index: 3, kind: input, shape index: {}]
  %s4 = inlined_call_operand.hbm [shape: bf16[512,256], index: 4, kind: input, shape index: {}]
  %s5 = inlined_call_operand.vmem [shape: f32[1,256], index: 5, kind: input, shape index: {}]
  %s6 = inlined_call_operand.vmem [shape: f32[1,256], index: 6, kind: input, shape index: {}]
  %s7 = inlined_call_operand.<no memory space> [shape: f32[1,1], index: 7, kind: input, shape index: {}]
  %s8 = inlined_call_operand.hbm [shape: f32[1,8], index: 8, kind: output, shape index: {}]
  %s9 = sld [smem:[#allocation0]]
  $region58: #{tpu_custom_call.1} parent=0
    _
  %s11 = ssub.s32 1, %s9
  %s12 = scalar_select 0, %s11, %s9
  %v13 = vstv %s7
  %14 = vst [vmem:[#allocation2] sm:$0x1] %v13
  $region1: #{tpu_custom_call.1} parent=0
    #allocation3 [shape = 'u8[4096]{0}', space=vmem, size = 0x1000, scoped, tag = 'input window, operand 0, single buffered']
    #allocation4 [shape = 's32[1]{0}', space=sflag, size = 0x4, scoped, tag = 'scoped memory for tpu_custom_call.1']
    #allocation5 [shape = 's32[1]{0}', space=sflag, size = 0x4, scoped, tag = 'scoped memory for tpu_custom_call.1']
    #allocation6 [shape = 'u8[4096]{0}', space=vmem, size = 0x1000, scoped, tag = 'input window, operand 1, single buffered']
    #allocation7 [shape = 's32[1]{0}', space=sflag, size = 0x4, scoped, tag = 'scoped memory for tpu_custom_call.1']
    #allocation8 [shape = 'u8[24576]{0}', space=vmem, size = 0x6000, scoped, tag = 'input window, operand 2, single buffered']
    #allocation9 [shape = 'u8[262144]{0}', space=vmem, size = 0x40000, scoped, tag = 'input window, operand 4, single buffered']
    #allocation10 [shape = 's32[1]{0}', space=sflag, size = 0x4, scoped, tag = 'scoped memory for tpu_custom_call.1']
    #allocation11 [shape = 'u8[512]{0}', space=vmem, size = 0x400, scoped, tag = 'output window, operand 0, single buffered']
    %15 = vsyncpa [#allocation4], 0
    %16 = vsyncpa [#allocation7], 0
    %17 = vsyncpa [#allocation10], 0
    %18 = vsyncpa [#allocation5], 0
    // Predicated region
    $region2: #{tpu_custom_call.1} parent=1 // pred_check
      _
    $region3: #{tpu_custom_call.1} parent=1 // pred_check_branch
      %20 = sbr.rel (0) target = $region5
    $region4: #{tpu_custom_call.1} parent=1 // pred_region
      %s22 = ssub.s32 128, 128
      %23 = vsyncadd [#allocation4], %s22
      %s25 = sshll.u32 [#allocation3], 4
      %s26 = int_to_ptr.vmem [resolvable:$true] %s25
      %28 = dma.hbm_to_vmem [thread:$0]  %s0, 128, %s26, [#allocation4]
    $region5: #{tpu_custom_call.1} parent=1 // pred_fallthru
      _
    // Predicated region
    $region6: #{tpu_custom_call.1} parent=1 // pred_check
      _
    $region7: #{tpu_custom_call.1} parent=1 // pred_check_branch
      %30 = sbr.rel (0) target = $region9
    $region8: #{tpu_custom_call.1} parent=1 // pred_region
      %s32 = ssub.s32 128, 128
      %33 = vsyncadd [#allocation7], %s32
      %s35 = sshll.u32 [#allocation6], 4
      %s36 = int_to_ptr.vmem [resolvable:$true] %s35
      %38 = dma.hbm_to_vmem [thread:$0]  %s1, 128, %s36, [#allocation7]
    $region9: #{tpu_custom_call.1} parent=1 // pred_fallthru
      _
    // Predicated region
    $region10: #{tpu_custom_call.1} parent=1 // pred_check
      _
    $region11: #{tpu_custom_call.1} parent=1 // pred_check_branch
      %40 = sbr.rel (0) target = $region13
    $region12: #{tpu_custom_call.1} parent=1 // pred_region
      %s42 = ssub.s32 768, 768
      %43 = vsyncadd [#allocation7], %s42
      %s44 = sshll.u32 [#allocation8], 4
      %s45 = int_to_ptr.vmem [resolvable:$true] %s44
      %50 = dma.hbm_to_vmem [thread:$0]  %s2, 768, %s45, [#allocation7], 256, 256, 16
    $region13: #{tpu_custom_call.1} parent=1 // pred_fallthru
      _
    // Predicated region
    $region14: #{tpu_custom_call.1} parent=1 // pred_check
      _
    $region15: #{tpu_custom_call.1} parent=1 // pred_check_branch
      %52 = sbr.rel (0) target = $region17
    $region16: #{tpu_custom_call.1} parent=1 // pred_region
      _
    $region17: #{tpu_custom_call.1} parent=1 // pred_fallthru
      _
    // Predicated region
    $region18: #{tpu_custom_call.1} parent=1 // pred_check
      _
    $region19: #{tpu_custom_call.1} parent=1 // pred_check_branch
      %54 = sbr.rel (0) target = $region21
    $region20: #{tpu_custom_call.1} parent=1 // pred_region
      %s56 = ssub.s32 8192, 8192
      %57 = vsyncadd [#allocation10], %s56
      %s58 = sshll.u32 [#allocation9], 4
      %s59 = int_to_ptr.vmem [resolvable:$true] %s58
      %64 = dma.hbm_to_vmem [thread:$0]  %s4, 8192, %s59, [#allocation10], 128, 128, 8
    $region21: #{tpu_custom_call.1} parent=1 // pred_fallthru
      _
    // Predicated region
    $region22: #{tpu_custom_call.1} parent=1 // pred_check
      _
    $region23: #{tpu_custom_call.1} parent=1 // pred_check_branch
      %66 = sbr.rel (0) target = $region25
    $region24: #{tpu_custom_call.1} parent=1 // pred_region
      _
    $region25: #{tpu_custom_call.1} parent=1 // pred_fallthru
      _
    // Predicated region
    $region26: #{tpu_custom_call.1} parent=1 // pred_check
      _
    $region27: #{tpu_custom_call.1} parent=1 // pred_check_branch
      %68 = sbr.rel (0) target = $region29
    $region28: #{tpu_custom_call.1} parent=1 // pred_region
      _
    $region29: #{tpu_custom_call.1} parent=1 // pred_fallthru
      _
    // Predicated region
    $region30: #{tpu_custom_call.1} parent=1 // pred_check
      _
    $region31: #{tpu_custom_call.1} parent=1 // pred_check_branch
      %70 = sbr.rel (0) target = $region33
    $region32: #{tpu_custom_call.1} parent=1 // pred_region
      _
    $region33: #{tpu_custom_call.1} parent=1 // pred_fallthru
      _
    // Predicated region
    $region34: #{tpu_custom_call.1} parent=1 // pred_check
      _
    $region35: #{tpu_custom_call.1} parent=1 // pred_check_branch
      %72 = sbr.rel (0) target = $region37
    $region36: #{tpu_custom_call.1} parent=1 // pred_region
      %73 = dma.done [#allocation4], 128
    $region37: #{tpu_custom_call.1} parent=1 // pred_fallthru
      _
    // Predicated region
    $region38: #{tpu_custom_call.1} parent=1 // pred_check
      _
    $region39: #{tpu_custom_call.1} parent=1 // pred_check_branch
      %75 = sbr.rel (0) target = $region41
    $region40: #{tpu_custom_call.1} parent=1 // pred_region
      %76 = dma.done [#allocation7], 128
    $region41: #{tpu_custom_call.1} parent=1 // pred_fallthru
      _
    // Predicated region
    $region42: #{tpu_custom_call.1} parent=1 // pred_check
      _
    $region43: #{tpu_custom_call.1} parent=1 // pred_check_branch
      %78 = sbr.rel (0) target = $region45
    $region44: #{tpu_custom_call.1} parent=1 // pred_region
      %79 = dma.done [#allocation7], 768
    $region45: #{tpu_custom_call.1} parent=1 // pred_fallthru
      _
    // Predicated region
    $region46: #{tpu_custom_call.1} parent=1 // pred_check
      _
    $region47: #{tpu_custom_call.1} parent=1 // pred_check_branch
      %81 = sbr.rel (0) target = $region49
    $region48: #{tpu_custom_call.1} parent=1 // pred_region
      %82 = dma.done [#allocation10], 8192
    $region49: #{tpu_custom_call.1} parent=1 // pred_fallthru
      _
    %v84 = vld [vmem:[#allocation3] sm:$0xff]
    %v85 = vld [vmem:[#allocation6] sm:$0xff]
    %87 = vrot.lane.b32.xlu0 %v85, 16
    %v88 = vpop.permute.xlu0 %87
    %vm90 = vcmask 130048
    %v91 = vsel %vm90, %v84, %v88
    %v92 = vpack.c.bf16 %v91, %v91
    %v93 = vld [vmem:[#allocation8] sm:$0xff]
    %v94 = vld [vmem:[#allocation8 + $0x8] sm:$0xff]
    %v95 = vld [vmem:[#allocation8 + $0x10] sm:$0xff]
    %v96 = vld [vmem:[#allocation8 + $0x18] sm:$0xff]
    %v97 = vld [vmem:[#allocation8 + $0x20] sm:$0xff]
    %v98 = vld [vmem:[#allocation8 + $0x28] sm:$0xff]
    %v99 = vld [vmem:[%s3] sm:$0xf]
    %v101 = vlaneseq
    %v102 = vshrl.u32 %v101, 7
    %v103 = vsub.s32 0, %v102
    %v104 = vrot.slane %v99, %v103
    %v105 = vlaneseq
    %v106 = vshrl.u32 %v105, 7
    %v107 = vsub.s32 1, %v106
    %v108 = vrot.slane %v99, %v107
    %v109 = vlaneseq
    %v110 = vshrl.u32 %v109, 7
    %v111 = vsub.s32 2, %v110
    %v112 = vrot.slane %v99, %v111
    %v113 = vlaneseq
    %v114 = vshrl.u32 %v113, 7
    %v115 = vsub.s32 3, %v114
    %v116 = vrot.slane %v99, %v115
    %v127 = vunpack.c.l.b16 %v93
    %v128 = vunpack.c.h.b16 %v93
    %v129 = vunpack.c.l.b16 %v94
    %v130 = vunpack.c.h.b16 %v94
    %v131 = vunpack.c.l.b16 %v95
    %v132 = vunpack.c.h.b16 %v95
    %v133 = vunpack.c.l.b16 %v96
    %v134 = vunpack.c.h.b16 %v96
    %v135 = vunpack.c.l.b16 %v97
    %v136 = vunpack.c.h.b16 %v97
    %v137 = vunpack.c.l.b16 %v98
    %v138 = vunpack.c.h.b16 %v98
    %v139 = vpack.c.b16 %v131, %v127
    %v140 = vpack.c.b16 %v132, %v128
    %v141 = vpack.c.b16 %v133, %v129
    %v142 = vpack.c.b16 %v134, %v130
    %v143 = vpack.c.b16 %v135, %v135
    %v144 = vpack.c.b16 %v136, %v136
    %v145 = vpack.c.b16 %v137, %v137
    %v146 = vpack.c.b16 %v138, %v138
    %vm151 = vcmask 195584
    %v153 = vsel %vm151, %v92, 0
    %vm155 = vcmask 1043456
    %v157 = vsel %vm155, %v143, 0
    %v160 = vsel %vm155, %v144, 0
    %v163 = vsel %vm155, %v145, 0
    %v166 = vsel %vm155, %v146, 0
    %168 = vmatprep.subr.bf16.mxu0 %v140
    %169 = vmatpush1.bf16.msra.mxu0 %v139
    %170 = vmatprep.subr.bf16.mxu0 %v160
    %171 = vmatpush1.bf16.msra.mxu0 %v157
    %172 = vmatprep.subr.bf16.mxu0 0
    %173 = vmatpush1.bf16.msra.mxu0 0
    %174 = vmatprep.subr.bf16.mxu0 0
    %175 = vmatpush1.bf16.msra.mxu0 0
    %176 = vmatprep.subr.bf16.mxu0 0
    %177 = vmatpush1.bf16.msra.mxu0 0
    %178 = vmatprep.subr.bf16.mxu0 0
    %179 = vmatpush1.bf16.msra.mxu0 0
    %180 = vmatprep.subr.bf16.mxu0 0
    %181 = vmatpush1.bf16.msra.mxu0 0
    %182 = vmatprep.subr.bf16.mxu0 0
    %183 = vmatpush1.bf16.msra.mxu0 0
    %184 = vmatprep.subr.bf16.mxu0 0
    %185 = vmatpush1.bf16.msra.mxu0 0
    %186 = vmatprep.subr.bf16.mxu0 0
    %187 = vmatpush1.bf16.msra.mxu0 0
    %188 = vmatprep.subr.bf16.mxu0 0
    %189 = vmatpush1.bf16.msra.mxu0 0
    %190 = vmatprep.subr.bf16.mxu0 0
    %191 = vmatpush1.bf16.msra.mxu0 0
    %192 = vmatprep.subr.bf16.mxu0 0
    %193 = vmatpush1.bf16.msra.mxu0 0
    %194 = vmatprep.subr.bf16.mxu0 0
    %195 = vmatpush1.bf16.msra.mxu0 0
    %196 = vmatprep.subr.bf16.mxu0 0
    %197 = vmatpush1.bf16.msra.mxu0 0
    %198 = vmatprep.subr.bf16.mxu0 0
    %199 = vmatpush1.bf16.msra.mxu0 0
    %200 = vmatprep.mubr.bf16.mxu0 0
    %201 = vmatmul.mubr.bf16.gmra.mrb[0].mxu0 %v153
    %v202 = vpop.f32.mrb[0].mxu0
    %v203 = vadd.f32 %v104, %v202
    %v204 = vpop.f32.mrb[0].mxu0
    %v205 = vadd.f32 %v108, %v204
    %v206 = vpop.f32.mrb[0].mxu0
    %v207 = vpop.f32.mrb[0].mxu0
    %208 = vdwg.mxu0
    %209 = vmatprep.subr.bf16.mxu0 %v142
    %210 = vmatpush1.bf16.msra.mxu0 %v141
    %211 = vmatprep.subr.bf16.mxu0 %v166
    %212 = vmatpush1.bf16.msra.mxu0 %v163
    %213 = vmatprep.subr.bf16.mxu0 0
    %214 = vmatpush1.bf16.msra.mxu0 0
    %215 = vmatprep.subr.bf16.mxu0 0
    %216 = vmatpush1.bf16.msra.mxu0 0
    %217 = vmatprep.subr.bf16.mxu0 0
    %218 = vmatpush1.bf16.msra.mxu0 0
    %219 = vmatprep.subr.bf16.mxu0 0
    %220 = vmatpush1.bf16.msra.mxu0 0
    %221 = vmatprep.subr.bf16.mxu0 0
    %222 = vmatpush1.bf16.msra.mxu0 0
    %223 = vmatprep.subr.bf16.mxu0 0
    %224 = vmatpush1.bf16.msra.mxu0 0
    %225 = vmatprep.subr.bf16.mxu0 0
    %226 = vmatpush1.bf16.msra.mxu0 0
    %227 = vmatprep.subr.bf16.mxu0 0
    %228 = vmatpush1.bf16.msra.mxu0 0
    %229 = vmatprep.subr.bf16.mxu0 0
    %230 = vmatpush1.bf16.msra.mxu0 0
    %231 = vmatprep.subr.bf16.mxu0 0
    %232 = vmatpush1.bf16.msra.mxu0 0
    %233 = vmatprep.subr.bf16.mxu0 0
    %234 = vmatpush1.bf16.msra.mxu0 0
    %235 = vmatprep.subr.bf16.mxu0 0
    %236 = vmatpush1.bf16.msra.mxu0 0
    %237 = vmatprep.subr.bf16.mxu0 0
    %238 = vmatpush1.bf16.msra.mxu0 0
    %239 = vmatprep.subr.bf16.mxu0 0
    %240 = vmatpush1.bf16.msra.mxu0 0
    %241 = vmatprep.mubr.bf16.mxu0 0
    %242 = vmatmul.mubr.bf16.gmra.mrb[0].mxu0 %v153
    %v243 = vpop.f32.mrb[0].mxu0
    %v244 = vadd.f32 %v112, %v243
    %v245 = vpop.f32.mrb[0].mxu0
    %v246 = vadd.f32 %v116, %v245
    %v247 = vpop.f32.mrb[0].mxu0
    %v248 = vpop.f32.mrb[0].mxu0
    %249 = vdwg.mxu0
    %v250 = vmax.f32 %v203, 0.0
    %v251 = vmax.f32 %v205, 0.0
    %v252 = vmax.f32 %v244, 0.0
    %v253 = vmax.f32 %v246, 0.0
    %v254 = vpack.c.bf16 %v250, %v250
    %v255 = vpack.c.bf16 %v251, %v251
    %v256 = vpack.c.bf16 %v252, %v252
    %v257 = vpack.c.bf16 %v253, %v253
    %v258 = vld [vmem:[#allocation9] sm:$0xff]
    %v259 = vld [vmem:[#allocation9 + $0x8] sm:$0xff]
    %v260 = vld [vmem:[#allocation9 + $0x10] sm:$0xff]
    %v261 = vld [vmem:[#allocation9 + $0x18] sm:$0xff]
    %v262 = vld [vmem:[#allocation9 + $0x20] sm:$0xff]
    %v263 = vld [vmem:[#allocation9 + $0x28] sm:$0xff]
    %v264 = vld [vmem:[#allocation9 + $0x30] sm:$0xff]
    %v265 = vld [vmem:[#allocation9 + $0x38] sm:$0xff]
    %v266 = vld [vmem:[#allocation9 + $0x40] sm:$0xff]
    %v267 = vld [vmem:[#allocation9 + $0x48] sm:$0xff]
    %v268 = vld [vmem:[#allocation9 + $0x50] sm:$0xff]
    %v269 = vld [vmem:[#allocation9 + $0x58] sm:$0xff]
    %v270 = vld [vmem:[#allocation9 + $0x60] sm:$0xff]
    %v271 = vld [vmem:[#allocation9 + $0x68] sm:$0xff]
    %v272 = vld [vmem:[#allocation9 + $0x70] sm:$0xff]
    %v273 = vld [vmem:[#allocation9 + $0x78] sm:$0xff]
    %v274 = vld [vmem:[#allocation9 + $0x80] sm:$0xff]
    %v275 = vld [vmem:[#allocation9 + $0x88] sm:$0xff]
    %v276 = vld [vmem:[#allocation9 + $0x90] sm:$0xff]
    %v277 = vld [vmem:[#allocation9 + $0x98] sm:$0xff]
    %v278 = vld [vmem:[#allocation9 + $0xa0] sm:$0xff]
    %v279 = vld [vmem:[#allocation9 + $0xa8] sm:$0xff]
    %v280 = vld [vmem:[#allocation9 + $0xb0] sm:$0xff]
    %v281 = vld [vmem:[#allocation9 + $0xb8] sm:$0xff]
    %v282 = vld [vmem:[#allocation9 + $0xc0] sm:$0xff]
    %v283 = vld [vmem:[#allocation9 + $0xc8] sm:$0xff]
    %v284 = vld [vmem:[#allocation9 + $0xd0] sm:$0xff]
    %v285 = vld [vmem:[#allocation9 + $0xd8] sm:$0xff]
    %v286 = vld [vmem:[#allocation9 + $0xe0] sm:$0xff]
    %v287 = vld [vmem:[#allocation9 + $0xe8] sm:$0xff]
    %v288 = vld [vmem:[#allocation9 + $0xf0] sm:$0xff]
    %v289 = vld [vmem:[#allocation9 + $0xf8] sm:$0xff]
    %v290 = vld [vmem:[#allocation9 + $0x100] sm:$0xff]
    %v291 = vld [vmem:[#allocation9 + $0x108] sm:$0xff]
    %v292 = vld [vmem:[#allocation9 + $0x110] sm:$0xff]
    %v293 = vld [vmem:[#allocation9 + $0x118] sm:$0xff]
    %v294 = vld [vmem:[#allocation9 + $0x120] sm:$0xff]
    %v295 = vld [vmem:[#allocation9 + $0x128] sm:$0xff]
    %v296 = vld [vmem:[#allocation9 + $0x130] sm:$0xff]
    %v297 = vld [vmem:[#allocation9 + $0x138] sm:$0xff]
    %v298 = vld [vmem:[#allocation9 + $0x140] sm:$0xff]
    %v299 = vld [vmem:[#allocation9 + $0x148] sm:$0xff]
    %v300 = vld [vmem:[#allocation9 + $0x150] sm:$0xff]
    %v301 = vld [vmem:[#allocation9 + $0x158] sm:$0xff]
    %v302 = vld [vmem:[#allocation9 + $0x160] sm:$0xff]
    %v303 = vld [vmem:[#allocation9 + $0x168] sm:$0xff]
    %v304 = vld [vmem:[#allocation9 + $0x170] sm:$0xff]
    %v305 = vld [vmem:[#allocation9 + $0x178] sm:$0xff]
    %v306 = vld [vmem:[#allocation9 + $0x180] sm:$0xff]
    %v307 = vld [vmem:[#allocation9 + $0x188] sm:$0xff]
    %v308 = vld [vmem:[#allocation9 + $0x190] sm:$0xff]
    %v309 = vld [vmem:[#allocation9 + $0x198] sm:$0xff]
    %v310 = vld [vmem:[#allocation9 + $0x1a0] sm:$0xff]
    %v311 = vld [vmem:[#allocation9 + $0x1a8] sm:$0xff]
    %v312 = vld [vmem:[#allocation9 + $0x1b0] sm:$0xff]
    %v313 = vld [vmem:[#allocation9 + $0x1b8] sm:$0xff]
    %v314 = vld [vmem:[#allocation9 + $0x1c0] sm:$0xff]
    %v315 = vld [vmem:[#allocation9 + $0x1c8] sm:$0xff]
    %v316 = vld [vmem:[#allocation9 + $0x1d0] sm:$0xff]
    %v317 = vld [vmem:[#allocation9 + $0x1d8] sm:$0xff]
    %v318 = vld [vmem:[#allocation9 + $0x1e0] sm:$0xff]
    %v319 = vld [vmem:[#allocation9 + $0x1e8] sm:$0xff]
    %v320 = vld [vmem:[#allocation9 + $0x1f0] sm:$0xff]
    %v321 = vld [vmem:[#allocation9 + $0x1f8] sm:$0xff]
    %v322 = vld [vmem:[%s5] sm:$0x3]
    %v324 = vlaneseq
    %v325 = vshrl.u32 %v324, 7
    %v326 = vsub.s32 0, %v325
    %v327 = vrot.slane %v322, %v326
    %v328 = vlaneseq
    %v329 = vshrl.u32 %v328, 7
    %v330 = vsub.s32 1, %v329
    %v331 = vrot.slane %v322, %v330
    %v398 = vunpack.c.l.b16 %v258
    %v399 = vunpack.c.h.b16 %v258
    %v400 = vunpack.c.l.b16 %v259
    %v401 = vunpack.c.h.b16 %v259
    %v402 = vunpack.c.l.b16 %v260
    %v403 = vunpack.c.h.b16 %v260
    %v404 = vunpack.c.l.b16 %v261
    %v405 = vunpack.c.h.b16 %v261
    %v406 = vunpack.c.l.b16 %v262
    %v407 = vunpack.c.h.b16 %v262
    %v408 = vunpack.c.l.b16 %v263
    %v409 = vunpack.c.h.b16 %v263
    %v410 = vunpack.c.l.b16 %v264
    %v411 = vunpack.c.h.b16 %v264
    %v412 = vunpack.c.l.b16 %v265
    %v413 = vunpack.c.h.b16 %v265
    %v414 = vunpack.c.l.b16 %v266
    %v415 = vunpack.c.h.b16 %v266
    %v416 = vunpack.c.l.b16 %v267
    %v417 = vunpack.c.h.b16 %v267
    %v418 = vunpack.c.l.b16 %v268
    %v419 = vunpack.c.h.b16 %v268
    %v420 = vunpack.c.l.b16 %v269
    %v421 = vunpack.c.h.b16 %v269
    %v422 = vunpack.c.l.b16 %v270
    %v423 = vunpack.c.h.b16 %v270
    %v424 = vunpack.c.l.b16 %v271
    %v425 = vunpack.c.h.b16 %v271
    %v426 = vunpack.c.l.b16 %v272
    %v427 = vunpack.c.h.b16 %v272
    %v428 = vunpack.c.l.b16 %v273
    %v429 = vunpack.c.h.b16 %v273
    %v430 = vunpack.c.l.b16 %v274
    %v431 = vunpack.c.h.b16 %v274
    %v432 = vunpack.c.l.b16 %v275
    %v433 = vunpack.c.h.b16 %v275
    %v434 = vunpack.c.l.b16 %v276
    %v435 = vunpack.c.h.b16 %v276
    %v436 = vunpack.c.l.b16 %v277
    %v437 = vunpack.c.h.b16 %v277
    %v438 = vunpack.c.l.b16 %v278
    %v439 = vunpack.c.h.b16 %v278
    %v440 = vunpack.c.l.b16 %v279
    %v441 = vunpack.c.h.b16 %v279
    %v442 = vunpack.c.l.b16 %v280
    %v443 = vunpack.c.h.b16 %v280
    %v444 = vunpack.c.l.b16 %v281
    %v445 = vunpack.c.h.b16 %v281
    %v446 = vunpack.c.l.b16 %v282
    %v447 = vunpack.c.h.b16 %v282
    %v448 = vunpack.c.l.b16 %v283
    %v449 = vunpack.c.h.b16 %v283
    %v450 = vunpack.c.l.b16 %v284
    %v451 = vunpack.c.h.b16 %v284
    %v452 = vunpack.c.l.b16 %v285
    %v453 = vunpack.c.h.b16 %v285
    %v454 = vunpack.c.l.b16 %v286
    %v455 = vunpack.c.h.b16 %v286
    %v456 = vunpack.c.l.b16 %v287
    %v457 = vunpack.c.h.b16 %v287
    %v458 = vunpack.c.l.b16 %v288
    %v459 = vunpack.c.h.b16 %v288
    %v460 = vunpack.c.l.b16 %v289
    %v461 = vunpack.c.h.b16 %v289
    %v462 = vunpack.c.l.b16 %v290
    %v463 = vunpack.c.h.b16 %v290
    %v464 = vunpack.c.l.b16 %v291
    %v465 = vunpack.c.h.b16 %v291
    %v466 = vunpack.c.l.b16 %v292
    %v467 = vunpack.c.h.b16 %v292
    %v468 = vunpack.c.l.b16 %v293
    %v469 = vunpack.c.h.b16 %v293
    %v470 = vunpack.c.l.b16 %v294
    %v471 = vunpack.c.h.b16 %v294
    %v472 = vunpack.c.l.b16 %v295
    %v473 = vunpack.c.h.b16 %v295
    %v474 = vunpack.c.l.b16 %v296
    %v475 = vunpack.c.h.b16 %v296
    %v476 = vunpack.c.l.b16 %v297
    %v477 = vunpack.c.h.b16 %v297
    %v478 = vunpack.c.l.b16 %v298
    %v479 = vunpack.c.h.b16 %v298
    %v480 = vunpack.c.l.b16 %v299
    %v481 = vunpack.c.h.b16 %v299
    %v482 = vunpack.c.l.b16 %v300
    %v483 = vunpack.c.h.b16 %v300
    %v484 = vunpack.c.l.b16 %v301
    %v485 = vunpack.c.h.b16 %v301
    %v486 = vunpack.c.l.b16 %v302
    %v487 = vunpack.c.h.b16 %v302
    %v488 = vunpack.c.l.b16 %v303
    %v489 = vunpack.c.h.b16 %v303
    %v490 = vunpack.c.l.b16 %v304
    %v491 = vunpack.c.h.b16 %v304
    %v492 = vunpack.c.l.b16 %v305
    %v493 = vunpack.c.h.b16 %v305
    %v494 = vunpack.c.l.b16 %v306
    %v495 = vunpack.c.h.b16 %v306
    %v496 = vunpack.c.l.b16 %v307
    %v497 = vunpack.c.h.b16 %v307
    %v498 = vunpack.c.l.b16 %v308
    %v499 = vunpack.c.h.b16 %v308
    %v500 = vunpack.c.l.b16 %v309
    %v501 = vunpack.c.h.b16 %v309
    %v502 = vunpack.c.l.b16 %v310
    %v503 = vunpack.c.h.b16 %v310
    %v504 = vunpack.c.l.b16 %v311
    %v505 = vunpack.c.h.b16 %v311
    %v506 = vunpack.c.l.b16 %v312
    %v507 = vunpack.c.h.b16 %v312
    %v508 = vunpack.c.l.b16 %v313
    %v509 = vunpack.c.h.b16 %v313
    %v510 = vunpack.c.l.b16 %v314
    %v511 = vunpack.c.h.b16 %v314
    %v512 = vunpack.c.l.b16 %v315
    %v513 = vunpack.c.h.b16 %v315
    %v514 = vunpack.c.l.b16 %v316
    %v515 = vunpack.c.h.b16 %v316
    %v516 = vunpack.c.l.b16 %v317
    %v517 = vunpack.c.h.b16 %v317
    %v518 = vunpack.c.l.b16 %v318
    %v519 = vunpack.c.h.b16 %v318
    %v520 = vunpack.c.l.b16 %v319
    %v521 = vunpack.c.h.b16 %v319
    %v522 = vunpack.c.l.b16 %v320
    %v523 = vunpack.c.h.b16 %v320
    %v524 = vunpack.c.l.b16 %v321
    %v525 = vunpack.c.h.b16 %v321
    %v526 = vpack.c.b16 %v400, %v398
    %v527 = vpack.c.b16 %v401, %v399
    %v528 = vpack.c.b16 %v404, %v402
    %v529 = vpack.c.b16 %v405, %v403
    %v530 = vpack.c.b16 %v408, %v406
    %v531 = vpack.c.b16 %v409, %v407
    %v532 = vpack.c.b16 %v412, %v410
    %v533 = vpack.c.b16 %v413, %v411
    %v534 = vpack.c.b16 %v416, %v414
    %v535 = vpack.c.b16 %v417, %v415
    %v536 = vpack.c.b16 %v420, %v418
    %v537 = vpack.c.b16 %v421, %v419
    %v538 = vpack.c.b16 %v424, %v422
    %v539 = vpack.c.b16 %v425, %v423
    %v540 = vpack.c.b16 %v428, %v426
    %v541 = vpack.c.b16 %v429, %v427
    %v542 = vpack.c.b16 %v432, %v430
    %v543 = vpack.c.b16 %v433, %v431
    %v544 = vpack.c.b16 %v436, %v434
    %v545 = vpack.c.b16 %v437, %v435
    %v546 = vpack.c.b16 %v440, %v438
    %v547 = vpack.c.b16 %v441, %v439
    %v548 = vpack.c.b16 %v444, %v442
    %v549 = vpack.c.b16 %v445, %v443
    %v550 = vpack.c.b16 %v448, %v446
    %v551 = vpack.c.b16 %v449, %v447
    %v552 = vpack.c.b16 %v452, %v450
    %v553 = vpack.c.b16 %v453, %v451
    %v554 = vpack.c.b16 %v456, %v454
    %v555 = vpack.c.b16 %v457, %v455
    %v556 = vpack.c.b16 %v460, %v458
    %v557 = vpack.c.b16 %v461, %v459
    %v558 = vpack.c.b16 %v464, %v462
    %v559 = vpack.c.b16 %v465, %v463
    %v560 = vpack.c.b16 %v468, %v466
    %v561 = vpack.c.b16 %v469, %v467
    %v562 = vpack.c.b16 %v472, %v470
    %v563 = vpack.c.b16 %v473, %v471
    %v564 = vpack.c.b16 %v476, %v474
    %v565 = vpack.c.b16 %v477, %v475
    %v566 = vpack.c.b16 %v480, %v478
    %v567 = vpack.c.b16 %v481, %v479
    %v568 = vpack.c.b16 %v484, %v482
    %v569 = vpack.c.b16 %v485, %v483
    %v570 = vpack.c.b16 %v488, %v486
    %v571 = vpack.c.b16 %v489, %v487
    %v572 = vpack.c.b16 %v492, %v490
    %v573 = vpack.c.b16 %v493, %v491
    %v574 = vpack.c.b16 %v496, %v494
    %v575 = vpack.c.b16 %v497, %v495
    %v576 = vpack.c.b16 %v500, %v498
    %v577 = vpack.c.b16 %v501, %v499
    %v578 = vpack.c.b16 %v504, %v502
    %v579 = vpack.c.b16 %v505, %v503
    %v580 = vpack.c.b16 %v508, %v506
    %v581 = vpack.c.b16 %v509, %v507
    %v582 = vpack.c.b16 %v512, %v510
    %v583 = vpack.c.b16 %v513, %v511
    %v584 = vpack.c.b16 %v516, %v514
    %v585 = vpack.c.b16 %v517, %v515
    %v586 = vpack.c.b16 %v520, %v518
    %v587 = vpack.c.b16 %v521, %v519
    %v588 = vpack.c.b16 %v524, %v522
    %v589 = vpack.c.b16 %v525, %v523
    %654 = vmatprep.subr.bf16.mxu0 %v527
    %655 = vmatpush1.bf16.msra.mxu0 %v526
    %656 = vmatprep.subr.bf16.mxu0 %v529
    %657 = vmatpush1.bf16.msra.mxu0 %v528
    %658 = vmatprep.subr.bf16.mxu0 %v531
    %659 = vmatpush1.bf16.msra.mxu0 %v530
    %660 = vmatprep.subr.bf16.mxu0 %v533
    %661 = vmatpush1.bf16.msra.mxu0 %v532
    %662 = vmatprep.subr.bf16.mxu0 %v535
    %663 = vmatpush1.bf16.msra.mxu0 %v534
    %664 = vmatprep.subr.bf16.mxu0 %v537
    %665 = vmatpush1.bf16.msra.mxu0 %v536
    %666 = vmatprep.subr.bf16.mxu0 %v539
    %667 = vmatpush1.bf16.msra.mxu0 %v538
    %668 = vmatprep.subr.bf16.mxu0 %v541
    %669 = vmatpush1.bf16.msra.mxu0 %v540
    %670 = vmatprep.subr.bf16.mxu0 %v543
    %671 = vmatpush1.bf16.msra.mxu0 %v542
    %672 = vmatprep.subr.bf16.mxu0 %v545
    %673 = vmatpush1.bf16.msra.mxu0 %v544
    %674 = vmatprep.subr.bf16.mxu0 %v547
    %675 = vmatpush1.bf16.msra.mxu0 %v546
    %676 = vmatprep.subr.bf16.mxu0 %v549
    %677 = vmatpush1.bf16.msra.mxu0 %v548
    %678 = vmatprep.subr.bf16.mxu0 %v551
    %679 = vmatpush1.bf16.msra.mxu0 %v550
    %680 = vmatprep.subr.bf16.mxu0 %v553
    %681 = vmatpush1.bf16.msra.mxu0 %v552
    %682 = vmatprep.subr.bf16.mxu0 %v555
    %683 = vmatpush1.bf16.msra.mxu0 %v554
    %684 = vmatprep.subr.bf16.mxu0 %v557
    %685 = vmatpush1.bf16.msra.mxu0 %v556
    %686 = vmatprep.mubr.bf16.mxu0 %v255
    %687 = vmatmul.mubr.bf16.gmra.mrb[0].mxu0 %v254
    %v688 = vpop.f32.mrb[0].mxu0
    %v689 = vadd.f32 %v327, %v688
    %v690 = vpop.f32.mrb[0].mxu0
    %v691 = vadd.f32 %v331, %v690
    %v692 = vpop.f32.mrb[0].mxu0
    %v693 = vpop.f32.mrb[0].mxu0
    %694 = vdwg.mxu0
    %695 = vmatprep.subr.bf16.mxu0 %v559
    %696 = vmatpush1.bf16.msra.mxu0 %v558
    %697 = vmatprep.subr.bf16.mxu0 %v561
    %698 = vmatpush1.bf16.msra.mxu0 %v560
    %699 = vmatprep.subr.bf16.mxu0 %v563
    %700 = vmatpush1.bf16.msra.mxu0 %v562
    %701 = vmatprep.subr.bf16.mxu0 %v565
    %702 = vmatpush1.bf16.msra.mxu0 %v564
    %703 = vmatprep.subr.bf16.mxu0 %v567
    %704 = vmatpush1.bf16.msra.mxu0 %v566
    %705 = vmatprep.subr.bf16.mxu0 %v569
    %706 = vmatpush1.bf16.msra.mxu0 %v568
    %707 = vmatprep.subr.bf16.mxu0 %v571
    %708 = vmatpush1.bf16.msra.mxu0 %v570
    %709 = vmatprep.subr.bf16.mxu0 %v573
    %710 = vmatpush1.bf16.msra.mxu0 %v572
    %711 = vmatprep.subr.bf16.mxu0 %v575
    %712 = vmatpush1.bf16.msra.mxu0 %v574
    %713 = vmatprep.subr.bf16.mxu0 %v577
    %714 = vmatpush1.bf16.msra.mxu0 %v576
    %715 = vmatprep.subr.bf16.mxu0 %v579
    %716 = vmatpush1.bf16.msra.mxu0 %v578
    %717 = vmatprep.subr.bf16.mxu0 %v581
    %718 = vmatpush1.bf16.msra.mxu0 %v580
    %719 = vmatprep.subr.bf16.mxu0 %v583
    %720 = vmatpush1.bf16.msra.mxu0 %v582
    %721 = vmatprep.subr.bf16.mxu0 %v585
    %722 = vmatpush1.bf16.msra.mxu0 %v584
    %723 = vmatprep.subr.bf16.mxu0 %v587
    %724 = vmatpush1.bf16.msra.mxu0 %v586
    %725 = vmatprep.subr.bf16.mxu0 %v589
    %726 = vmatpush1.bf16.msra.mxu0 %v588
    %727 = vmatprep.mubr.bf16.mxu0 %v257
    %728 = vmatmul.mubr.bf16.gmra.mrb[0].mxu0 %v256
    %v729 = vpop.f32.mrb[0].mxu0
    %v730 = vadd.f32 %v689, %v729
    %v731 = vpop.f32.mrb[0].mxu0
    %v732 = vadd.f32 %v691, %v731
    %v733 = vpop.f32.mrb[0].mxu0
    %v734 = vpop.f32.mrb[0].mxu0
    %735 = vdwg.mxu0
    %v736 = vmax.f32 %v730, 0.0
    %v737 = vmax.f32 %v732, 0.0
    %v738 = vld [vmem:[%s6] sm:$0x3]
    %v740 = vlaneseq
    %v741 = vshrl.u32 %v740, 7
    %v742 = vsub.s32 0, %v741
    %v743 = vrot.slane %v738, %v742
    %v744 = vlaneseq
    %v745 = vshrl.u32 %v744, 7
    %v746 = vsub.s32 1, %v745
    %v747 = vrot.slane %v738, %v746
    %v750 = vmul.f32 %v736, %v743
    %v751 = vmul.f32 %v737, %v747
    %v752 = vadd.f32 %v750, %v751
    %753 = vadd.xlane.f32.xlu0 %v752
    %v754 = vpop.xlane.xlu0 %753
    %v755 = vld [vmem:[#allocation2] sm:$0x1]
    %757 = vset.pattern.permute.xlu0 0
    %758 = vperm.xlu0 %757, %v755
    %v759 = vpop.permute.xlu0 %758
    %v761 = vlaneseq
    %v762 = vshrl.u32 %v761, 7
    %v763 = vsub.s32 0, %v762
    %v764 = vrot.slane %v759, %v763
    %v765 = vadd.f32 %v754, %v764
    %v767 = vlaneseq
    %v768 = vand.u32 %v767, 127
    %v769 = vlaneseq
    %v770 = vshrl.u32 %v769, 7
    %v771 = vsub.s32 %v768, %v770
    %v772 = vrot.slane %v765, %v771
    %vm774 = vcmask 57344
    %775 = vst.msk [vmem:[#allocation11] sm:$0x1] %vm774, %v772
    // Predicated region
    $region50: #{tpu_custom_call.1} parent=1 // pred_check
      _
    $region51: #{tpu_custom_call.1} parent=1 // pred_check_branch
      %777 = sbr.rel (0) target = $region53
    $region52: #{tpu_custom_call.1} parent=1 // pred_region
      %s779 = ssub.s32 16, 16
      %780 = vsyncadd [#allocation5], %s779
      %s782 = sshll.u32 [#allocation11], 4
      %s783 = int_to_ptr.vmem [resolvable:$true] %s782
      %785 = dma.vmem_to_hbm [thread:$0]  %s783, 16, %s8, [#allocation5]
    $region53: #{tpu_custom_call.1} parent=1 // pred_fallthru
      _
    // Predicated region
    $region54: #{tpu_custom_call.1} parent=1 // pred_check
      _
    $region55: #{tpu_custom_call.1} parent=1 // pred_check_branch
      %787 = sbr.rel (0) target = $region57
    $region56: #{tpu_custom_call.1} parent=1 // pred_region
      %788 = dma.done [#allocation5], 16
    $region57: #{tpu_custom_call.1} parent=1 // pred_fallthru
      _
    %789 = vsyncpa [#allocation4], 1
    %790 = vsyncpa [#allocation7], 1
    %791 = vsyncpa [#allocation10], 1
    %792 = vsyncpa [#allocation5], 1

</llo_original>
